<compile_context>
chip_gen: v7x
topology: tpu7x:2x2x1
jax: 0.10.0
libtpu: 0.0.40
codegen_flags: <defaults>
</compile_context>

<pallas_src>
import numpy as np
import jax
import jax.numpy as jnp
from jax import lax
from jax.experimental import pallas as pl
from jax.experimental.pallas import tpu as pltpu


def _round_up(x, m):
    return ((x + m - 1) // m) * m


def _neck_kernel(p_ref, w1_ref, scale_ref, shift_ref, w2_ref, b2_ref, o_ref):
    # p_ref:     (1, TM, Kp)     bf16  pre-packed im2col patches (lane-dense)
    # w1_ref:    (Kp, Cmidp)     bf16  packed & zero-padded 3x3 weight
    # scale_ref: (1, Cmidp)      f32   fused BN scale (zero on padded channels)
    # shift_ref: (1, Cmidp)      f32   fused BN shift + conv1 bias (zero on padded channels)
    # w2_ref:    (Cmidp, Coutp)  bf16  zero-padded 1x1 conv weight
    # b2_ref:    (1, Coutp)      f32   zero-padded 1x1 conv bias
    # o_ref:     (1, TM, Coutp)  f32   lane-dense output tile
    # 3x3 conv == one fused-K MXU matmul over the pre-packed patches (f32 accumulation).
    acc = jnp.dot(p_ref[0], w1_ref[...], preferred_element_type=jnp.float32)
    # Fused inference BatchNorm + conv1 bias, then ReLU (f32 on the VPU).
    y = jnp.maximum(acc * scale_ref[0] + shift_ref[0], 0.0)
    # 1x1 conv == channel matmul (bf16 operands, f32 accumulation) + bias.
    out = jnp.dot(y.astype(jnp.bfloat16), w2_ref[...],
                  preferred_element_type=jnp.float32) + b2_ref[0]
    o_ref[0] = out.astype(o_ref.dtype)


def neck_basic_block_pallas(x_nchw, params):
    """x_nchw: (N, Cin, H, W) float32.  Returns (N, Cout, H, W) float32."""
    w1 = params["w1"]          # (Cmid, Cin, 3, 3)  OIHW (PyTorch layout)
    b1 = params["b1"]          # (Cmid,)
    gamma = params["gamma"]    # (Cmid,)
    beta = params["beta"]      # (Cmid,)
    rmean = params["rmean"]    # (Cmid,)
    rvar = params["rvar"]      # (Cmid,)
    w2 = params["w2"]          # (Cout, Cmid, 1, 1)
    b2 = params["b2"]          # (Cout,)
    eps = 1e-5

    N, Cin, H, W = x_nchw.shape
    Cmid = w1.shape[0]
    Cout = w2.shape[0]
    KH, KW = 3, 3
    K = KH * KW * Cin

    # Lane-dense padded sizes (no-ops for realistic channel counts >= 128).
    Kp = _round_up(K, 128)
    Cmidp = _round_up(Cmid, 128)
    Coutp = _round_up(Cout, 128)

    # Spatial tile over the flattened H*W axis: aim for MXU M dim of 256-512 rows.
    HW = H * W
    TM = HW
    for cand in (512, 256, 128, 64, 32, 16, 8):
        if HW % cand == 0:
            TM = cand
            break
    num_t = HW // TM

    # ---- Wrapper-side glue (plain XLA; overlapped with the kernel via the cost estimate) ----
    # im2col: (N,H,W,Cin) padded "same" -> (N, H*W, 9*Cin), row order (ky, kx, c).
    x_nhwc = jnp.transpose(x_nchw, (0, 2, 3, 1)).astype(jnp.float32)        # (N,H,W,Cin)
    x_pad = jnp.pad(x_nhwc, ((0, 0), (1, 1), (1, 1), (0, 0)))               # (N,H+2,W+2,Cin)
    taps = [x_pad[:, ky:ky + H, kx:kx + W, :] for ky in range(KH) for kx in range(KW)]
    patches = jnp.concatenate(taps, axis=-1).reshape(N, HW, K)              # (N,HW,9*Cin)
    patches = jnp.pad(patches, ((0, 0), (0, 0), (0, Kp - K))).astype(jnp.bfloat16)

    # Packed 3x3 weight: (Cmid,Cin,KH,KW) -> (KH,KW,Cin,Cmid) -> (K, Cmid), zero-pad to (Kp, Cmidp).
    w1_packed = jnp.transpose(w1, (2, 3, 1, 0)).reshape(K, Cmid)
    w1_packed = jnp.pad(w1_packed, ((0, Kp - K), (0, Cmidp - Cmid))).astype(jnp.bfloat16)

    # Fold BN (inference) and conv1 bias: BN(conv + b1) = conv*s + ((b1 - rmean)*s + beta).
    s = gamma / jnp.sqrt(rvar + eps)
    scale = jnp.pad(s.reshape(1, Cmid), ((0, 0), (0, Cmidp - Cmid))).astype(jnp.float32)
    shift = jnp.pad(((b1 - rmean) * s + beta).reshape(1, Cmid),
                    ((0, 0), (0, Cmidp - Cmid))).astype(jnp.float32)

    # 1x1 conv weight/bias, zero-padded.
    w2_mat = jnp.transpose(w2[:, :, 0, 0], (1, 0))                          # (Cmid, Cout)
    w2_mat = jnp.pad(w2_mat, ((0, Cmidp - Cmid), (0, Coutp - Cout))).astype(jnp.bfloat16)
    b2_row = jnp.pad(b2.reshape(1, Cout), ((0, 0), (0, Coutp - Cout))).astype(jnp.float32)

    # ---- Per-step VMEM footprint -> vmem limit (headroom, capped for v7x's 64 MiB) ----
    per_step = (2 * TM * Kp * 2              # patches block, double-buffered, bf16
                + 2 * TM * Coutp * 4         # output block, double-buffered, f32
                + 2 * (Kp * Cmidp * 2 + Cmidp * Coutp * 2 + 2 * Cmidp * 4 + Coutp * 4))
    vmem_limit = int(min(max(2 * per_step, 8 * 1024 * 1024), 48 * 1024 * 1024))

    cost = pl.CostEstimate(
        flops=2 * N * HW * (Kp * Cmidp + Cmidp * Coutp),
        transcendentals=0,
        bytes_accessed=(N * HW * Kp * 2 + N * HW * Coutp * 4
                        + Kp * Cmidp * 2 + Cmidp * Coutp * 2 + 2 * Cmidp * 4 + Coutp * 4),
    )

    out_flat = pl.pallas_call(
        _neck_kernel,
        out_shape=jax.ShapeDtypeStruct((N, HW, Coutp), jnp.float32),
        grid_spec=pltpu.PrefetchScalarGridSpec(
            num_scalar_prefetch=0,
            grid=(N, num_t),
            in_specs=[
                pl.BlockSpec((1, TM, Kp), lambda n, t: (n, t, 0)),
                pl.BlockSpec((Kp, Cmidp), lambda n, t: (0, 0)),
                pl.BlockSpec((1, Cmidp), lambda n, t: (0, 0)),
                pl.BlockSpec((1, Cmidp), lambda n, t: (0, 0)),
                pl.BlockSpec((Cmidp, Coutp), lambda n, t: (0, 0)),
                pl.BlockSpec((1, Coutp), lambda n, t: (0, 0)),
            ],
            out_specs=pl.BlockSpec((1, TM, Coutp), lambda n, t: (n, t, 0)),
        ),
        compiler_params=pltpu.CompilerParams(
            dimension_semantics=("parallel", "parallel"),
            vmem_limit_bytes=vmem_limit,
        ),
        cost_estimate=cost,
    )(patches, w1_packed, scale, shift, w2_mat, b2_row)

    # Slice padded channels away, restore NCHW.
    out_nhwc = out_flat[:, :, :Cout].reshape(N, H, W, Cout)
    return jnp.transpose(out_nhwc, (0, 3, 1, 2))


def _reference(x_nchw, params):
    """Pure-JAX f32 reference of the same forward (for correctness check)."""
    eps = 1e-5
    y = lax.conv_general_dilated(
        x_nchw, params["w1"], window_strides=(1, 1), padding=((1, 1), (1, 1)),
        dimension_numbers=("NCHW", "OIHW", "NCHW"))
    y = y + params["b1"][None, :, None, None]
    s = params["gamma"] / jnp.sqrt(params["rvar"] + eps)
    y = (y - params["rmean"][None, :, None, None]) * s[None, :, None, None] \
        + params["beta"][None, :, None, None]
    y = jnp.maximum(y, 0.0)
    y = lax.conv_general_dilated(
        y, params["w2"], window_strides=(1, 1), padding=((0, 0), (0, 0)),
        dimension_numbers=("NCHW", "OIHW", "NCHW"))
    y = y + params["b2"][None, :, None, None]
    return y


def _init_params(key, in_channels, mid_channels, out_channels):
    ks = jax.random.split(key, 8)
    return {
        "w1": 0.1 * jax.random.normal(ks[0], (mid_channels, in_channels, 3, 3), jnp.float32),
        "b1": 0.1 * jax.random.normal(ks[1], (mid_channels,), jnp.float32),
        "gamma": 1.0 + 0.1 * jax.random.normal(ks[2], (mid_channels,), jnp.float32),
        "beta": 0.1 * jax.random.normal(ks[3], (mid_channels,), jnp.float32),
        "rmean": 0.1 * jax.random.normal(ks[4], (mid_channels,), jnp.float32),
        "rvar": jnp.abs(jax.random.normal(ks[5], (mid_channels,), jnp.float32)) + 0.5,
        "w2": 0.1 * jax.random.normal(ks[6], (out_channels, mid_channels, 1, 1), jnp.float32),
        "b2": 0.1 * jax.random.normal(ks[7], (out_channels,), jnp.float32),
    }


if __name__ == "__main__":
    key = jax.random.PRNGKey(0)
    k_x, k_p = jax.random.split(key)

    N, Cin, H, W = 2, 4, 16, 16
    Cmid, Cout = 8, 8

    x = jax.random.normal(k_x, (N, Cin, H, W), jnp.float32)
    params = _init_params(k_p, Cin, Cmid, Cout)

    out = jax.jit(neck_basic_block_pallas)(x, params)
    out = jax.block_until_ready(out)

    ref = jax.block_until_ready(_reference(x, params))
    assert out.shape == (N, Cout, H, W)
    # bf16 matmul operands (f32 accumulation) -> loosened tolerance vs f32 reference.
    np.testing.assert_allclose(np.asarray(out), np.asarray(ref), rtol=5e-2, atol=5e-2)

    print("KERNEL_OK")
</pallas_src>

<mosaic_0001>
module attributes {stable_mosaic.version = 11 : i64} {
  func.func @_neck_kernel(%arg0: i32, %arg1: i32, %arg2: memref<1x256x128xbf16, #tpu.memory_space<vmem>>, %arg3: memref<128x128xbf16, #tpu.memory_space<vmem>>, %arg4: memref<1x128xf32, #tpu.memory_space<vmem>>, %arg5: memref<1x128xf32, #tpu.memory_space<vmem>>, %arg6: memref<128x128xbf16, #tpu.memory_space<vmem>>, %arg7: memref<1x128xf32, #tpu.memory_space<vmem>>, %arg8: memref<1x256x128xf32, #tpu.memory_space<vmem>>) attributes {dimension_semantics = [#tpu.dimension_semantics<parallel>, #tpu.dimension_semantics<parallel>], iteration_bounds = array<i64: 2, 1>, scalar_prefetch = 0 : i64, scratch_operands = 0 : i64, tpu.core_type = #tpu.core_type<tc>, window_params = [{transform_indices = @transform_0, window_bounds = array<i64: 1, 256, 128>}, {pipeline_mode = #tpu.pipeline_mode<synchronous>, transform_indices = @transform_1, window_bounds = array<i64: 128, 128>}, {pipeline_mode = #tpu.pipeline_mode<synchronous>, transform_indices = @transform_2, window_bounds = array<i64: 1, 128>}, {pipeline_mode = #tpu.pipeline_mode<synchronous>, transform_indices = @transform_3, window_bounds = array<i64: 1, 128>}, {pipeline_mode = #tpu.pipeline_mode<synchronous>, transform_indices = @transform_4, window_bounds = array<i64: 128, 128>}, {pipeline_mode = #tpu.pipeline_mode<synchronous>, transform_indices = @transform_5, window_bounds = array<i64: 1, 128>}, {transform_indices = @transform_6, window_bounds = array<i64: 1, 256, 128>}]} {
    %c0 = arith.constant 0 : index
    %c0_0 = arith.constant 0 : index
    %c0_1 = arith.constant 0 : index
    %0 = vector.load %arg2[%c0, %c0_0, %c0_1] : memref<1x256x128xbf16, #tpu.memory_space<vmem>>, vector<1x256x128xbf16>
    %1 = vector.shape_cast %0 : vector<1x256x128xbf16> to vector<256x128xbf16>
    %c0_2 = arith.constant 0 : index
    %c0_3 = arith.constant 0 : index
    %2 = vector.load %arg3[%c0_2, %c0_3] : memref<128x128xbf16, #tpu.memory_space<vmem>>, vector<128x128xbf16>
    %cst = arith.constant dense<0.000000e+00> : vector<256x128xf32>
    %3 = tpu.matmul %1, %2, %cst {dimension_numbers = #tpu.dot_dimension_numbers<[1], [0], [0], [1], [0, 0, 1, 1], [], []>} : vector<256x128xbf16>, vector<128x128xbf16>, vector<256x128xf32> -> vector<256x128xf32>
    %c0_4 = arith.constant 0 : index
    %c0_5 = arith.constant 0 : index
    %4 = vector.load %arg4[%c0_4, %c0_5] : memref<1x128xf32, #tpu.memory_space<vmem>>, vector<1x128xf32>
    %5 = vector.shape_cast %4 : vector<1x128xf32> to vector<128xf32>
    %6 = vector.shape_cast %5 : vector<128xf32> to vector<1x128xf32>
    %7 = vector.broadcast %6 : vector<1x128xf32> to vector<256x128xf32>
    %8 = arith.mulf %3, %7 : vector<256x128xf32>
    %c0_6 = arith.constant 0 : index
    %c0_7 = arith.constant 0 : index
    %9 = vector.load %arg5[%c0_6, %c0_7] : memref<1x128xf32, #tpu.memory_space<vmem>>, vector<1x128xf32>
    %10 = vector.shape_cast %9 : vector<1x128xf32> to vector<128xf32>
    %11 = vector.shape_cast %10 : vector<128xf32> to vector<1x128xf32>
    %12 = vector.broadcast %11 : vector<1x128xf32> to vector<256x128xf32>
    %13 = arith.addf %8, %12 : vector<256x128xf32>
    %cst_8 = arith.constant 0.000000e+00 : f32
    %14 = vector.broadcast %cst_8 : f32 to vector<256x128xf32>
    %15 = arith.maximumf %13, %14 : vector<256x128xf32>
    %16 = arith.truncf %15 : vector<256x128xf32> to vector<256x128xbf16>
    %c0_9 = arith.constant 0 : index
    %c0_10 = arith.constant 0 : index
    %17 = vector.load %arg6[%c0_9, %c0_10] : memref<128x128xbf16, #tpu.memory_space<vmem>>, vector<128x128xbf16>
    %cst_11 = arith.constant dense<0.000000e+00> : vector<256x128xf32>
    %18 = tpu.matmul %16, %17, %cst_11 {dimension_numbers = #tpu.dot_dimension_numbers<[1], [0], [0], [1], [0, 0, 1, 1], [], []>} : vector<256x128xbf16>, vector<128x128xbf16>, vector<256x128xf32> -> vector<256x128xf32>
    %c0_12 = arith.constant 0 : index
    %c0_13 = arith.constant 0 : index
    %19 = vector.load %arg7[%c0_12, %c0_13] : memref<1x128xf32, #tpu.memory_space<vmem>>, vector<1x128xf32>
    %20 = vector.shape_cast %19 : vector<1x128xf32> to vector<128xf32>
    %21 = vector.shape_cast %20 : vector<128xf32> to vector<1x128xf32>
    %22 = vector.broadcast %21 : vector<1x128xf32> to vector<256x128xf32>
    %23 = arith.addf %18, %22 : vector<256x128xf32>
    %c0_14 = arith.constant 0 : index
    %c0_15 = arith.constant 0 : index
    %c0_16 = arith.constant 0 : index
    %24 = vector.load %arg8[%c0_14, %c0_15, %c0_16] : memref<1x256x128xf32, #tpu.memory_space<vmem>>, vector<1x256x128xf32>
    %25 = vector.shape_cast %24 : vector<1x256x128xf32> to vector<256x128xf32>
    %26 = vector.shape_cast %23 : vector<256x128xf32> to vector<1x256x128xf32>
    tpu.vector_store %arg8[%c0_14, %c0_15, %c0_16], %26 {strides = array<i32>} : memref<1x256x128xf32, #tpu.memory_space<vmem>>, vector<1x256x128xf32>,
    return
  }
  func.func @transform_0(%arg0: i32, %arg1: i32) -> (i32, i32, i32) {
    %c0_i32 = arith.constant 0 : i32
    %c0_i32_0 = arith.constant 0 : i32
    return %arg0, %arg1, %c0_i32 : i32, i32, i32
  }
  func.func @transform_1(%arg0: i32, %arg1: i32) -> (i32, i32) {
    %c0_i32 = arith.constant 0 : i32
    %c0_i32_0 = arith.constant 0 : i32
    %c0_i32_1 = arith.constant 0 : i32
    return %c0_i32, %c0_i32_0 : i32, i32
  }
  func.func @transform_2(%arg0: i32, %arg1: i32) -> (i32, i32) {
    %c0_i32 = arith.constant 0 : i32
    %c0_i32_0 = arith.constant 0 : i32
    %c0_i32_1 = arith.constant 0 : i32
    return %c0_i32, %c0_i32_0 : i32, i32
  }
  func.func @transform_3(%arg0: i32, %arg1: i32) -> (i32, i32) {
    %c0_i32 = arith.constant 0 : i32
    %c0_i32_0 = arith.constant 0 : i32
    %c0_i32_1 = arith.constant 0 : i32
    return %c0_i32, %c0_i32_0 : i32, i32
  }
  func.func @transform_4(%arg0: i32, %arg1: i32) -> (i32, i32) {
    %c0_i32 = arith.constant 0 : i32
    %c0_i32_0 = arith.constant 0 : i32
    %c0_i32_1 = arith.constant 0 : i32
    return %c0_i32, %c0_i32_0 : i32, i32
  }
  func.func @transform_5(%arg0: i32, %arg1: i32) -> (i32, i32) {
    %c0_i32 = arith.constant 0 : i32
    %c0_i32_0 = arith.constant 0 : i32
    %c0_i32_1 = arith.constant 0 : i32
    return %c0_i32, %c0_i32_0 : i32, i32
  }
  func.func @transform_6(%arg0: i32, %arg1: i32) -> (i32, i32, i32) {
    %c0_i32 = arith.constant 0 : i32
    %c0_i32_0 = arith.constant 0 : i32
    return %arg0, %arg1, %c0_i32 : i32, i32, i32
  }
}

</mosaic_0001>

<llo_original>
// kernel: neck_basic_block_pallas.1
$region0: #{neck_basic_block_pallas.1}
  #allocation0 [shape = 'u32[]', space=smem, size = 0x4, offset = 0x4, fixed_abs, tag = 'smem constant byte address 0x4 - core index']
  #allocation1 [shape = 'u32[144,128]{1,0:T(1,128)}', space=vmem, size = 0x12000, scoped, tag = 'internal scratch']
  %s0 = inlined_call_operand.vmem [shape: bf16[2,256,128], index: 0, kind: input, shape index: {}]
  %s1 = inlined_call_operand.vmem [shape: bf16[128,128], index: 1, kind: input, shape index: {}]
  %s2 = inlined_call_operand.vmem [shape: f32[1,128], index: 2, kind: input, shape index: {}]
  %s3 = inlined_call_operand.vmem [shape: f32[1,128], index: 3, kind: input, shape index: {}]
  %s4 = inlined_call_operand.vmem [shape: bf16[128,128], index: 4, kind: input, shape index: {}]
  %s5 = inlined_call_operand.vmem [shape: f32[1,128], index: 5, kind: input, shape index: {}]
  %s6 = inlined_call_operand.vmem [shape: f32[2,256,128], index: 6, kind: output, shape index: {}]
  %s7 = sld [smem:[#allocation0]]
  $region57: #{neck_basic_block_pallas.1} parent=0
    _
  %s9 = ssub.s32 1, %s7
  %s10 = scalar_select 0, %s9, %s7
  loop: start=0, step=1, limit=4
  $region2: #{neck_basic_block_pallas.1} parent=0 // loop_pre_header
    _
  $region3: #{neck_basic_block_pallas.1} parent=0 // loop_header
    %s12 = sphi 0, %s16
    %p13 = scmp.ge.s32.totalorder %s12, 4
    %s19 = sphi 0, %s31
    %s20 = sphi 0, %s27
    %s21 = sphi 0, %s19
    %s22 = sphi 0, %s20
    %s23 = sphi 0, %s21
    %s24 = sphi 0, %s22
    %s36 = sphi 0, %s38
    %s39 = sphi 0, %s36
    %s40 = sphi 0, %s39
    %s56 = sphi 0, %s40
    %s60 = sphi 0, %s60
    %s62 = sphi 0, %s60
    %s63 = sphi 0, %s62
    %s77 = sphi 0, %s63
    %s81 = sphi 0, %s81
    %s83 = sphi 0, %s81
    %s84 = sphi 0, %s83
    %s98 = sphi 0, %s84
    %s102 = sphi 0, %s102
    %s104 = sphi 0, %s102
    %s105 = sphi 0, %s104
    %s119 = sphi 0, %s105
    %s123 = sphi 0, %s123
    %s125 = sphi 0, %s123
    %s126 = sphi 0, %s125
    %s140 = sphi 0, %s126
    %s144 = sphi 0, %s144
    %s146 = sphi 0, %s144
    %s147 = sphi 0, %s146
    %s161 = sphi 0, %s147
    %s169 = sphi 0, %s171
    %s172 = sphi 0, %s169
    %s173 = sphi 0, %s172
    %s189 = sphi 0, %s173
  $region4: #{neck_basic_block_pallas.1} parent=0 // loop_header_branch
    %15 = sbr.rel (%p13) target = $region8
  $region5: #{neck_basic_block_pallas.1} parent=0 // loop_body
    %s17 = ssub.s32 %s12, 1
    %s18 = ssub.s32 %s12, 2
    %s25 = sadd.s32 1, %s20
    %p26 = scmp.ge.s32.totalorder %s25, 1
    %s27 = scalar_select %p26, 0, %s25
    %s28 = sadd.s32 1, %s19
    %s29 = scalar_select %p26, %s28, %s19
    %p30 = scmp.ge.s32.totalorder %s29, 2
    %s31 = scalar_select %p30, 0, %s29
    %s32 = ssub.s32 %s19, %s31
    %s33 = ssub.s32 %s20, %s27
    %s34 = sor.u32 %s32, %s33
    %p35 = scmp.eq.s32.totalorder %s34, 0
    %s37 = sadd.s32 %s36, 1
    %s38 = scalar_select %p35, %s36, %s37
    %p41 = pneg %p35
    %p42 = scmp.eq.s32.totalorder %s12, 1
    %p43 = por %p41, %p42
    %p44 = scmp.ne.s32.totalorder %s36, %s39
    %p45 = scmp.eq.s32.totalorder %s12, 0
    %p46 = por %p44, %p45
    %p47 = scmp.ne.s32.totalorder %s36, %s39
    %p48 = scmp.eq.s32.totalorder %s17, 1
    %p49 = por %p47, %p48
    %p50 = scmp.ne.s32.totalorder %s39, %s40
    %p51 = scmp.eq.s32.totalorder %s17, 0
    %p52 = por %p50, %p51
    %p53 = scmp.ne.s32.totalorder %s39, %s40
    %p54 = scmp.eq.s32.totalorder %s18, 1
    %p55 = por %p53, %p54
    %p57 = scmp.ne.s32.totalorder %s40, %s56
    %p58 = scmp.eq.s32.totalorder %s18, 0
    %p59 = por %p57, %p58
    %s61 = sadd.s32 %s60, 1
    %p64 = scmp.eq.s32.totalorder %s12, 1
    %p65 = scmp.ne.s32.totalorder %s60, %s62
    %p66 = scmp.eq.s32.totalorder %s12, 0
    %p67 = por %p65, %p66
    %p68 = scmp.ne.s32.totalorder %s60, %s62
    %p69 = scmp.eq.s32.totalorder %s17, 1
    %p70 = por %p68, %p69
    %p71 = scmp.ne.s32.totalorder %s62, %s63
    %p72 = scmp.eq.s32.totalorder %s17, 0
    %p73 = por %p71, %p72
    %p74 = scmp.ne.s32.totalorder %s62, %s63
    %p75 = scmp.eq.s32.totalorder %s18, 1
    %p76 = por %p74, %p75
    %p78 = scmp.ne.s32.totalorder %s63, %s77
    %p79 = scmp.eq.s32.totalorder %s18, 0
    %p80 = por %p78, %p79
    %s82 = sadd.s32 %s81, 1
    %p85 = scmp.eq.s32.totalorder %s12, 1
    %p86 = scmp.ne.s32.totalorder %s81, %s83
    %p87 = scmp.eq.s32.totalorder %s12, 0
    %p88 = por %p86, %p87
    %p89 = scmp.ne.s32.totalorder %s81, %s83
    %p90 = scmp.eq.s32.totalorder %s17, 1
    %p91 = por %p89, %p90
    %p92 = scmp.ne.s32.totalorder %s83, %s84
    %p93 = scmp.eq.s32.totalorder %s17, 0
    %p94 = por %p92, %p93
    %p95 = scmp.ne.s32.totalorder %s83, %s84
    %p96 = scmp.eq.s32.totalorder %s18, 1
    %p97 = por %p95, %p96
    %p99 = scmp.ne.s32.totalorder %s84, %s98
    %p100 = scmp.eq.s32.totalorder %s18, 0
    %p101 = por %p99, %p100
    %s103 = sadd.s32 %s102, 1
    %p106 = scmp.eq.s32.totalorder %s12, 1
    %p107 = scmp.ne.s32.totalorder %s102, %s104
    %p108 = scmp.eq.s32.totalorder %s12, 0
    %p109 = por %p107, %p108
    %p110 = scmp.ne.s32.totalorder %s102, %s104
    %p111 = scmp.eq.s32.totalorder %s17, 1
    %p112 = por %p110, %p111
    %p113 = scmp.ne.s32.totalorder %s104, %s105
    %p114 = scmp.eq.s32.totalorder %s17, 0
    %p115 = por %p113, %p114
    %p116 = scmp.ne.s32.totalorder %s104, %s105
    %p117 = scmp.eq.s32.totalorder %s18, 1
    %p118 = por %p116, %p117
    %p120 = scmp.ne.s32.totalorder %s105, %s119
    %p121 = scmp.eq.s32.totalorder %s18, 0
    %p122 = por %p120, %p121
    %s124 = sadd.s32 %s123, 1
    %p127 = scmp.eq.s32.totalorder %s12, 1
    %p128 = scmp.ne.s32.totalorder %s123, %s125
    %p129 = scmp.eq.s32.totalorder %s12, 0
    %p130 = por %p128, %p129
    %p131 = scmp.ne.s32.totalorder %s123, %s125
    %p132 = scmp.eq.s32.totalorder %s17, 1
    %p133 = por %p131, %p132
    %p134 = scmp.ne.s32.totalorder %s125, %s126
    %p135 = scmp.eq.s32.totalorder %s17, 0
    %p136 = por %p134, %p135
    %p137 = scmp.ne.s32.totalorder %s125, %s126
    %p138 = scmp.eq.s32.totalorder %s18, 1
    %p139 = por %p137, %p138
    %p141 = scmp.ne.s32.totalorder %s126, %s140
    %p142 = scmp.eq.s32.totalorder %s18, 0
    %p143 = por %p141, %p142
    %s145 = sadd.s32 %s144, 1
    %p148 = scmp.eq.s32.totalorder %s12, 1
    %p149 = scmp.ne.s32.totalorder %s144, %s146
    %p150 = scmp.eq.s32.totalorder %s12, 0
    %p151 = por %p149, %p150
    %p152 = scmp.ne.s32.totalorder %s144, %s146
    %p153 = scmp.eq.s32.totalorder %s17, 1
    %p154 = por %p152, %p153
    %p155 = scmp.ne.s32.totalorder %s146, %s147
    %p156 = scmp.eq.s32.totalorder %s17, 0
    %p157 = por %p155, %p156
    %p158 = scmp.ne.s32.totalorder %s146, %s147
    %p159 = scmp.eq.s32.totalorder %s18, 1
    %p160 = por %p158, %p159
    %p162 = scmp.ne.s32.totalorder %s147, %s161
    %p163 = scmp.eq.s32.totalorder %s18, 0
    %p164 = por %p162, %p163
    %s165 = ssub.s32 %s19, %s31
    %s166 = ssub.s32 %s20, %s27
    %s167 = sor.u32 %s165, %s166
    %p168 = scmp.eq.s32.totalorder %s167, 0
    %s170 = sadd.s32 %s169, 1
    %s171 = scalar_select %p168, %s169, %s170
    %p174 = pneg %p168
    %p175 = scmp.eq.s32.totalorder %s12, 1
    %p176 = por %p174, %p175
    %p177 = scmp.ne.s32.totalorder %s169, %s172
    %p178 = scmp.eq.s32.totalorder %s12, 0
    %p179 = por %p177, %p178
    %p180 = scmp.ne.s32.totalorder %s169, %s172
    %p181 = scmp.eq.s32.totalorder %s17, 1
    %p182 = por %p180, %p181
    %p183 = scmp.ne.s32.totalorder %s172, %s173
    %p184 = scmp.eq.s32.totalorder %s17, 0
    %p185 = por %p183, %p184
    %p186 = scmp.ne.s32.totalorder %s172, %s173
    %p187 = scmp.eq.s32.totalorder %s18, 1
    %p188 = por %p186, %p187
    %p190 = scmp.ne.s32.totalorder %s173, %s189
    %p191 = scmp.eq.s32.totalorder %s18, 0
    %p192 = por %p190, %p191
    %p193 = scmp.le.s32.totalorder 1, %s12
    %p194 = scmp.lt.s32.totalorder %s12, 3
    %p195 = pnand %p193, %p194
    %p196 = pneg %p195
    // Predicated region
    $region9: #{neck_basic_block_pallas.1} parent=5 // pred_check
      _
    $region10: #{neck_basic_block_pallas.1} parent=5 // pred_check_branch
      %198 = sbr.rel (%p195) target = $region12
    $region11: #{neck_basic_block_pallas.1} parent=5 // pred_region
      %s199 = ssub.s32 %s12, 1
      // Predicated region
      $region13: #{neck_basic_block_pallas.1} parent=11 // pred_check
        %p200 = pneg %p73
      $region14: #{neck_basic_block_pallas.1} parent=11 // pred_check_branch
        %202 = sbr.rel (%p200) target = $region16
      $region15: #{neck_basic_block_pallas.1} parent=11 // pred_region
        _
      $region16: #{neck_basic_block_pallas.1} parent=11 // pred_fallthru
        _
      // Predicated region
      $region17: #{neck_basic_block_pallas.1} parent=11 // pred_check
        %p203 = pneg %p94
      $region18: #{neck_basic_block_pallas.1} parent=11 // pred_check_branch
        %205 = sbr.rel (%p203) target = $region20
      $region19: #{neck_basic_block_pallas.1} parent=11 // pred_region
        _
      $region20: #{neck_basic_block_pallas.1} parent=11 // pred_fallthru
        _
      // Predicated region
      $region21: #{neck_basic_block_pallas.1} parent=11 // pred_check
        %p206 = pneg %p115
      $region22: #{neck_basic_block_pallas.1} parent=11 // pred_check_branch
        %208 = sbr.rel (%p206) target = $region24
      $region23: #{neck_basic_block_pallas.1} parent=11 // pred_region
        _
      $region24: #{neck_basic_block_pallas.1} parent=11 // pred_fallthru
        _
      // Predicated region
      $region25: #{neck_basic_block_pallas.1} parent=11 // pred_check
        %p209 = pneg %p136
      $region26: #{neck_basic_block_pallas.1} parent=11 // pred_check_branch
        %211 = sbr.rel (%p209) target = $region28
      $region27: #{neck_basic_block_pallas.1} parent=11 // pred_region
        _
      $region28: #{neck_basic_block_pallas.1} parent=11 // pred_fallthru
        _
      // Predicated region
      $region29: #{neck_basic_block_pallas.1} parent=11 // pred_check
        %p212 = pneg %p157
      $region30: #{neck_basic_block_pallas.1} parent=11 // pred_check_branch
        %214 = sbr.rel (%p212) target = $region32
      $region31: #{neck_basic_block_pallas.1} parent=11 // pred_region
        _
      $region32: #{neck_basic_block_pallas.1} parent=11 // pred_fallthru
        _
    $region12: #{neck_basic_block_pallas.1} parent=5 // pred_fallthru
      _
    %p215 = scmp.lt.s32.totalorder %s12, 2
    // Predicated region
    $region33: #{neck_basic_block_pallas.1} parent=5 // pred_check
      %p216 = pneg %p215
    $region34: #{neck_basic_block_pallas.1} parent=5 // pred_check_branch
      %218 = sbr.rel (%p216) target = $region36
    $region35: #{neck_basic_block_pallas.1} parent=5 // pred_region
      // Predicated region
      $region37: #{neck_basic_block_pallas.1} parent=35 // pred_check
        %p219 = pneg %p46
      $region38: #{neck_basic_block_pallas.1} parent=35 // pred_check_branch
        %221 = sbr.rel (%p219) target = $region40
      $region39: #{neck_basic_block_pallas.1} parent=35 // pred_region
        %s222 = smul.u32 32, %s20
        %p223 = scmp.lt.s32.totalorder %s19, 1
        %s224 = scalar_select %p223, %s19, 1
        %p225 = scmp.lt.s32.totalorder %s222, 31
        %s226 = scalar_select %p225, %s222, 31
        %s227 = smul.addr %s224, 32
        %s228 = sadd.s32 %s226, %s227
        %s229 = smul.addr %s228, 4
        %s230 = scalar_lea.vmem %s0, %s229
        %s231 = smul.u32 32, %s20
      $region40: #{neck_basic_block_pallas.1} parent=35 // pred_fallthru
        _
    $region36: #{neck_basic_block_pallas.1} parent=5 // pred_fallthru
      _
    %p232 = scmp.le.s32.totalorder 1, %s12
    %p233 = scmp.lt.s32.totalorder %s12, 3
    %p234 = pnand %p232, %p233
    %p235 = pneg %p234
    // Predicated region
    $region41: #{neck_basic_block_pallas.1} parent=5 // pred_check
      _
    $region42: #{neck_basic_block_pallas.1} parent=5 // pred_check_branch
      %237 = sbr.rel (%p234) target = $region44
    $region43: #{neck_basic_block_pallas.1} parent=5 // pred_region
      %s238 = ssub.s32 %s12, 1
      %s239 = smul.u32 32, %s22
      %p240 = scmp.lt.s32.totalorder %s21, 1
      %s241 = scalar_select %p240, %s21, 1
      %p242 = scmp.lt.s32.totalorder %s239, 31
      %s243 = scalar_select %p242, %s239, 31
      %s244 = smul.addr %s241, 32
      %s245 = sadd.s32 %s243, %s244
      %s246 = smul.addr %s245, 4
      %s247 = scalar_lea.vmem %s0, %s246
      %p248 = pneg %p52
      %p249 = pneg %p49
      %p250 = pneg %p73
      %p251 = pneg %p70
      %p252 = pneg %p94
      %p253 = pneg %p91
      %p254 = pneg %p115
      %p255 = pneg %p112
      %p256 = pneg %p136
      %p257 = pneg %p133
      %p258 = pneg %p157
      %p259 = pneg %p154
      %p260 = pneg %p185
      %p261 = pneg %p182
      %s262 = smul.u32 32, %s22
      %p263 = scmp.lt.s32.totalorder %s21, 1
      %s264 = scalar_select %p263, %s21, 1
      %p265 = scmp.lt.s32.totalorder %s262, 31
      %s266 = scalar_select %p265, %s262, 31
      %s267 = smul.addr %s264, 32
      %s268 = sadd.s32 %s266, %s267
      %s269 = smul.addr %s268, 8
      %s270 = scalar_lea.vmem %s6, %s269
      %s271 = smul.u32 32, %s22
      %p272 = scmp.lt.s32.totalorder %s21, 1
      %s273 = scalar_select %p272, %s21, 1
      %p274 = scmp.lt.s32.totalorder %s271, 31
      %s275 = scalar_select %p274, %s271, 31
      %s276 = smul.addr %s273, 32
      %s277 = sadd.s32 %s275, %s276
      %s278 = smul.addr %s277, 4
      %s279 = scalar_lea.vmem %s0, %s278
      %s280 = smul.u32 32, %s22
      %s281 = smul.u32 32, %s22
      %p282 = scmp.lt.s32.totalorder %s21, 1
      %s283 = scalar_select %p282, %s21, 1
      %p284 = scmp.lt.s32.totalorder %s281, 31
      %s285 = scalar_select %p284, %s281, 31
      %s286 = smul.addr %s283, 32
      %s287 = sadd.s32 %s285, %s286
      %s288 = smul.addr %s287, 8
      %s289 = scalar_lea.vmem %s6, %s288
      %s290 = smul.u32 32, %s22
      %v292 = vld [vmem:[%s279] sm:$0xf]
      %v293 = vld [vmem:[%s279 + $0x4] sm:$0xf]
      %v294 = vld [vmem:[%s279 + $0x8] sm:$0xf]
      %v295 = vld [vmem:[%s279 + $0xc] sm:$0xf]
      %v296 = vld [vmem:[%s279 + $0x10] sm:$0xf]
      %v297 = vld [vmem:[%s279 + $0x14] sm:$0xf]
      %v298 = vld [vmem:[%s279 + $0x18] sm:$0xf]
      %v299 = vld [vmem:[%s279 + $0x1c] sm:$0xf]
      %v300 = vld [vmem:[%s279 + $0x20] sm:$0xf]
      %v301 = vld [vmem:[%s279 + $0x24] sm:$0xf]
      %v302 = vld [vmem:[%s279 + $0x28] sm:$0xf]
      %v303 = vld [vmem:[%s279 + $0x2c] sm:$0xf]
      %v304 = vld [vmem:[%s279 + $0x30] sm:$0xf]
      %v305 = vld [vmem:[%s279 + $0x34] sm:$0xf]
      %v306 = vld [vmem:[%s279 + $0x38] sm:$0xf]
      %v307 = vld [vmem:[%s279 + $0x3c] sm:$0xf]
      %v308 = vld [vmem:[%s279 + $0x40] sm:$0xf]
      %v309 = vld [vmem:[%s279 + $0x44] sm:$0xf]
      %v310 = vld [vmem:[%s279 + $0x48] sm:$0xf]
      %v311 = vld [vmem:[%s279 + $0x4c] sm:$0xf]
      %v312 = vld [vmem:[%s279 + $0x50] sm:$0xf]
      %v313 = vld [vmem:[%s279 + $0x54] sm:$0xf]
      %v314 = vld [vmem:[%s279 + $0x58] sm:$0xf]
      %v315 = vld [vmem:[%s279 + $0x5c] sm:$0xf]
      %v316 = vld [vmem:[%s279 + $0x60] sm:$0xf]
      %v317 = vld [vmem:[%s279 + $0x64] sm:$0xf]
      %v318 = vld [vmem:[%s279 + $0x68] sm:$0xf]
      %v319 = vld [vmem:[%s279 + $0x6c] sm:$0xf]
      %v320 = vld [vmem:[%s279 + $0x70] sm:$0xf]
      %v321 = vld [vmem:[%s279 + $0x74] sm:$0xf]
      %v322 = vld [vmem:[%s279 + $0x78] sm:$0xf]
      %v323 = vld [vmem:[%s279 + $0x7c] sm:$0xf]
      %v324 = vld [vmem:[%s1] sm:$0xf]
      %v325 = vld [vmem:[%s1 + $0x4] sm:$0xf]
      %v326 = vld [vmem:[%s1 + $0x8] sm:$0xf]
      %v327 = vld [vmem:[%s1 + $0xc] sm:$0xf]
      %v328 = vld [vmem:[%s1 + $0x10] sm:$0xf]
      %v329 = vld [vmem:[%s1 + $0x14] sm:$0xf]
      %v330 = vld [vmem:[%s1 + $0x18] sm:$0xf]
      %v331 = vld [vmem:[%s1 + $0x1c] sm:$0xf]
      %v332 = vld [vmem:[%s1 + $0x20] sm:$0xf]
      %v333 = vld [vmem:[%s1 + $0x24] sm:$0xf]
      %v334 = vld [vmem:[%s1 + $0x28] sm:$0xf]
      %v335 = vld [vmem:[%s1 + $0x2c] sm:$0xf]
      %v336 = vld [vmem:[%s1 + $0x30] sm:$0xf]
      %v337 = vld [vmem:[%s1 + $0x34] sm:$0xf]
      %v338 = vld [vmem:[%s1 + $0x38] sm:$0xf]
      %v339 = vld [vmem:[%s1 + $0x3c] sm:$0xf]
      %v372 = vunpack.c.l.b16 %v292
      %v373 = vunpack.c.l.b16 %v293
      %v374 = vunpack.c.l.b16 %v294
      %v375 = vunpack.c.l.b16 %v295
      %v376 = vunpack.c.l.b16 %v296
      %v377 = vunpack.c.l.b16 %v297
      %v378 = vunpack.c.l.b16 %v298
      %v379 = vunpack.c.l.b16 %v299
      %v380 = vunpack.c.l.b16 %v300
      %v381 = vunpack.c.l.b16 %v301
      %v382 = vunpack.c.l.b16 %v302
      %v383 = vunpack.c.l.b16 %v303
      %v384 = vunpack.c.l.b16 %v304
      %v385 = vunpack.c.l.b16 %v305
      %v386 = vunpack.c.l.b16 %v306
      %v387 = vunpack.c.l.b16 %v307
      %v388 = vunpack.c.l.b16 %v308
      %v389 = vunpack.c.l.b16 %v309
      %v390 = vunpack.c.l.b16 %v310
      %v391 = vunpack.c.l.b16 %v311
      %v392 = vunpack.c.l.b16 %v312
      %v393 = vunpack.c.l.b16 %v313
      %v394 = vunpack.c.l.b16 %v314
      %v395 = vunpack.c.l.b16 %v315
      %v396 = vunpack.c.l.b16 %v316
      %v397 = vunpack.c.l.b16 %v317
      %v398 = vunpack.c.l.b16 %v318
      %v399 = vunpack.c.l.b16 %v319
      %v400 = vunpack.c.l.b16 %v320
      %v401 = vunpack.c.l.b16 %v321
      %v402 = vunpack.c.l.b16 %v322
      %v403 = vunpack.c.l.b16 %v323
      %v404 = vpack.c.b16 %v373, %v372
      %v405 = vpack.c.b16 %v375, %v374
      %v406 = vpack.c.b16 %v377, %v376
      %v407 = vpack.c.b16 %v379, %v378
      %v408 = vpack.c.b16 %v381, %v380
      %v409 = vpack.c.b16 %v383, %v382
      %v410 = vpack.c.b16 %v385, %v384
      %v411 = vpack.c.b16 %v387, %v386
      %v412 = vpack.c.b16 %v389, %v388
      %v413 = vpack.c.b16 %v391, %v390
      %v414 = vpack.c.b16 %v393, %v392
      %v415 = vpack.c.b16 %v395, %v394
      %v416 = vpack.c.b16 %v397, %v396
      %v417 = vpack.c.b16 %v399, %v398
      %v418 = vpack.c.b16 %v401, %v400
      %v419 = vpack.c.b16 %v403, %v402
      %v452 = vunpack.c.l.b16 %v324
      %v453 = vunpack.c.l.b16 %v325
      %v454 = vunpack.c.l.b16 %v326
      %v455 = vunpack.c.l.b16 %v327
      %v456 = vunpack.c.l.b16 %v328
      %v457 = vunpack.c.l.b16 %v329
      %v458 = vunpack.c.l.b16 %v330
      %v459 = vunpack.c.l.b16 %v331
      %v460 = vunpack.c.l.b16 %v332
      %v461 = vunpack.c.l.b16 %v333
      %v462 = vunpack.c.l.b16 %v334
      %v463 = vunpack.c.l.b16 %v335
      %v464 = vunpack.c.l.b16 %v336
      %v465 = vunpack.c.l.b16 %v337
      %v466 = vunpack.c.l.b16 %v338
      %v467 = vunpack.c.l.b16 %v339
      %v468 = vpack.c.b16 %v453, %v452
      %v469 = vpack.c.b16 %v455, %v454
      %v470 = vpack.c.b16 %v457, %v456
      %v471 = vpack.c.b16 %v459, %v458
      %v472 = vpack.c.b16 %v461, %v460
      %v473 = vpack.c.b16 %v463, %v462
      %v474 = vpack.c.b16 %v465, %v464
      %v475 = vpack.c.b16 %v467, %v466
      %484 = vmatprep.subr.bf16.mxu0 0
      %485 = vmatpush1.bf16.msra.mxu0 %v468
      %486 = vmatprep.subr.bf16.mxu0 0
      %487 = vmatpush1.bf16.msra.mxu0 %v469
      %488 = vmatprep.subr.bf16.mxu0 0
      %489 = vmatpush1.bf16.msra.mxu0 %v470
      %490 = vmatprep.subr.bf16.mxu0 0
      %491 = vmatpush1.bf16.msra.mxu0 %v471
      %492 = vmatprep.subr.bf16.mxu0 0
      %493 = vmatpush1.bf16.msra.mxu0 %v472
      %494 = vmatprep.subr.bf16.mxu0 0
      %495 = vmatpush1.bf16.msra.mxu0 %v473
      %496 = vmatprep.subr.bf16.mxu0 0
      %497 = vmatpush1.bf16.msra.mxu0 %v474
      %498 = vmatprep.subr.bf16.mxu0 0
      %499 = vmatpush1.bf16.msra.mxu0 %v475
      %500 = vmatprep.subr.bf16.mxu0 0
      %501 = vmatpush1.bf16.msra.mxu0 0
      %502 = vmatprep.subr.bf16.mxu0 0
      %503 = vmatpush1.bf16.msra.mxu0 0
      %504 = vmatprep.subr.bf16.mxu0 0
      %505 = vmatpush1.bf16.msra.mxu0 0
      %506 = vmatprep.subr.bf16.mxu0 0
      %507 = vmatpush1.bf16.msra.mxu0 0
      %508 = vmatprep.subr.bf16.mxu0 0
      %509 = vmatpush1.bf16.msra.mxu0 0
      %510 = vmatprep.subr.bf16.mxu0 0
      %511 = vmatpush1.bf16.msra.mxu0 0
      %512 = vmatprep.subr.bf16.mxu0 0
      %513 = vmatpush1.bf16.msra.mxu0 0
      %514 = vmatprep.subr.bf16.mxu0 0
      %515 = vmatpush1.bf16.msra.mxu0 0
      %516 = vmatprep.mubr.bf16.mxu0 0
      %517 = vmatmul.mubr.bf16.gmra.mrb[0].mxu0 %v404
      %v518 = vpop.f32.mrb[0].mxu0
      %v519 = vadd.f32 0.0, %v518
      %v520 = vpop.f32.mrb[0].mxu0
      %v521 = vpop.f32.mrb[0].mxu0
      %v522 = vadd.f32 0.0, %v521
      %v523 = vpop.f32.mrb[0].mxu0
      %524 = vmatprep.mubr.bf16.mxu0 0
      %525 = vmatmul.mubr.bf16.gmra.mrb[0].mxu0 %v405
      %v526 = vpop.f32.mrb[0].mxu0
      %v527 = vadd.f32 0.0, %v526
      %v528 = vpop.f32.mrb[0].mxu0
      %v529 = vpop.f32.mrb[0].mxu0
      %v530 = vadd.f32 0.0, %v529
      %v531 = vpop.f32.mrb[0].mxu0
      %532 = vmatprep.mubr.bf16.mxu0 0
      %533 = vmatmul.mubr.bf16.gmra.mrb[0].mxu0 %v406
      %v534 = vpop.f32.mrb[0].mxu0
      %v535 = vadd.f32 0.0, %v534
      %v536 = vpop.f32.mrb[0].mxu0
      %v537 = vpop.f32.mrb[0].mxu0
      %v538 = vadd.f32 0.0, %v537
      %v539 = vpop.f32.mrb[0].mxu0
      %540 = vmatprep.mubr.bf16.mxu0 0
      %541 = vmatmul.mubr.bf16.gmra.mrb[0].mxu0 %v407
      %v542 = vpop.f32.mrb[0].mxu0
      %v543 = vadd.f32 0.0, %v542
      %v544 = vpop.f32.mrb[0].mxu0
      %v545 = vpop.f32.mrb[0].mxu0
      %v546 = vadd.f32 0.0, %v545
      %v547 = vpop.f32.mrb[0].mxu0
      %548 = vmatprep.mubr.bf16.mxu0 0
      %549 = vmatmul.mubr.bf16.gmra.mrb[0].mxu0 %v408
      %v550 = vpop.f32.mrb[0].mxu0
      %v551 = vadd.f32 0.0, %v550
      %v552 = vpop.f32.mrb[0].mxu0
      %v553 = vpop.f32.mrb[0].mxu0
      %v554 = vadd.f32 0.0, %v553
      %v555 = vpop.f32.mrb[0].mxu0
      %556 = vmatprep.mubr.bf16.mxu0 0
      %557 = vmatmul.mubr.bf16.gmra.mrb[0].mxu0 %v409
      %v558 = vpop.f32.mrb[0].mxu0
      %v559 = vadd.f32 0.0, %v558
      %v560 = vpop.f32.mrb[0].mxu0
      %v561 = vpop.f32.mrb[0].mxu0
      %v562 = vadd.f32 0.0, %v561
      %v563 = vpop.f32.mrb[0].mxu0
      %564 = vmatprep.mubr.bf16.mxu0 0
      %565 = vmatmul.mubr.bf16.gmra.mrb[0].mxu0 %v410
      %v566 = vpop.f32.mrb[0].mxu0
      %v567 = vadd.f32 0.0, %v566
      %v568 = vpop.f32.mrb[0].mxu0
      %v569 = vpop.f32.mrb[0].mxu0
      %v570 = vadd.f32 0.0, %v569
      %v571 = vpop.f32.mrb[0].mxu0
      %572 = vmatprep.mubr.bf16.mxu0 0
      %573 = vmatmul.mubr.bf16.gmra.mrb[0].mxu0 %v411
      %v574 = vpop.f32.mrb[0].mxu0
      %v575 = vadd.f32 0.0, %v574
      %v576 = vpop.f32.mrb[0].mxu0
      %v577 = vpop.f32.mrb[0].mxu0
      %v578 = vadd.f32 0.0, %v577
      %v579 = vpop.f32.mrb[0].mxu0
      %580 = vmatprep.mubr.bf16.mxu0 0
      %581 = vmatmul.mubr.bf16.gmra.mrb[0].mxu0 %v412
      %v582 = vpop.f32.mrb[0].mxu0
      %v583 = vadd.f32 0.0, %v582
      %v584 = vpop.f32.mrb[0].mxu0
      %v585 = vpop.f32.mrb[0].mxu0
      %v586 = vadd.f32 0.0, %v585
      %v587 = vpop.f32.mrb[0].mxu0
      %588 = vmatprep.mubr.bf16.mxu0 0
      %589 = vmatmul.mubr.bf16.gmra.mrb[0].mxu0 %v413
      %v590 = vpop.f32.mrb[0].mxu0
      %v591 = vadd.f32 0.0, %v590
      %v592 = vpop.f32.mrb[0].mxu0
      %v593 = vpop.f32.mrb[0].mxu0
      %v594 = vadd.f32 0.0, %v593
      %v595 = vpop.f32.mrb[0].mxu0
      %596 = vmatprep.mubr.bf16.mxu0 0
      %597 = vmatmul.mubr.bf16.gmra.mrb[0].mxu0 %v414
      %v598 = vpop.f32.mrb[0].mxu0
      %v599 = vadd.f32 0.0, %v598
      %v600 = vpop.f32.mrb[0].mxu0
      %v601 = vpop.f32.mrb[0].mxu0
      %v602 = vadd.f32 0.0, %v601
      %v603 = vpop.f32.mrb[0].mxu0
      %604 = vmatprep.mubr.bf16.mxu0 0
      %605 = vmatmul.mubr.bf16.gmra.mrb[0].mxu0 %v415
      %v606 = vpop.f32.mrb[0].mxu0
      %v607 = vadd.f32 0.0, %v606
      %v608 = vpop.f32.mrb[0].mxu0
      %v609 = vpop.f32.mrb[0].mxu0
      %v610 = vadd.f32 0.0, %v609
      %v611 = vpop.f32.mrb[0].mxu0
      %612 = vmatprep.mubr.bf16.mxu0 0
      %613 = vmatmul.mubr.bf16.gmra.mrb[0].mxu0 %v416
      %v614 = vpop.f32.mrb[0].mxu0
      %v615 = vadd.f32 0.0, %v614
      %v616 = vpop.f32.mrb[0].mxu0
      %v617 = vpop.f32.mrb[0].mxu0
      %v618 = vadd.f32 0.0, %v617
      %v619 = vpop.f32.mrb[0].mxu0
      %620 = vmatprep.mubr.bf16.mxu0 0
      %621 = vmatmul.mubr.bf16.gmra.mrb[0].mxu0 %v417
      %v622 = vpop.f32.mrb[0].mxu0
      %v623 = vadd.f32 0.0, %v622
      %v624 = vpop.f32.mrb[0].mxu0
      %v625 = vpop.f32.mrb[0].mxu0
      %v626 = vadd.f32 0.0, %v625
      %v627 = vpop.f32.mrb[0].mxu0
      %628 = vmatprep.mubr.bf16.mxu0 0
      %629 = vmatmul.mubr.bf16.gmra.mrb[0].mxu0 %v418
      %v630 = vpop.f32.mrb[0].mxu0
      %v631 = vadd.f32 0.0, %v630
      %v632 = vpop.f32.mrb[0].mxu0
      %v633 = vpop.f32.mrb[0].mxu0
      %v634 = vadd.f32 0.0, %v633
      %v635 = vpop.f32.mrb[0].mxu0
      %636 = vmatprep.mubr.bf16.mxu0 0
      %637 = vmatmul.mubr.bf16.gmra.mrb[0].mxu0 %v419
      %v638 = vpop.f32.mrb[0].mxu0
      %v639 = vadd.f32 0.0, %v638
      %v640 = vpop.f32.mrb[0].mxu0
      %v641 = vpop.f32.mrb[0].mxu0
      %v642 = vadd.f32 0.0, %v641
      %v643 = vpop.f32.mrb[0].mxu0
      %644 = vdwg.mxu0
      %v645 = vld [vmem:[%s2] sm:$0x1]
      %v647 = vlaneseq
      %v648 = vshrl.u32 %v647, 7
      %v649 = vsub.s32 0, %v648
      %v650 = vrot.slane %v645, %v649
      %v652 = vmul.f32 %v519, %v650
      %v653 = vmul.f32 %v522, %v650
      %v654 = vmul.f32 %v527, %v650
      %v655 = vmul.f32 %v530, %v650
      %v656 = vmul.f32 %v535, %v650
      %v657 = vmul.f32 %v538, %v650
      %v658 = vmul.f32 %v543, %v650
      %v659 = vmul.f32 %v546, %v650
      %v660 = vmul.f32 %v551, %v650
      %v661 = vmul.f32 %v554, %v650
      %v662 = vmul.f32 %v559, %v650
      %v663 = vmul.f32 %v562, %v650
      %v664 = vmul.f32 %v567, %v650
      %v665 = vmul.f32 %v570, %v650
      %v666 = vmul.f32 %v575, %v650
      %v667 = vmul.f32 %v578, %v650
      %v668 = vmul.f32 %v583, %v650
      %v669 = vmul.f32 %v586, %v650
      %v670 = vmul.f32 %v591, %v650
      %v671 = vmul.f32 %v594, %v650
      %v672 = vmul.f32 %v599, %v650
      %v673 = vmul.f32 %v602, %v650
      %v674 = vmul.f32 %v607, %v650
      %v675 = vmul.f32 %v610, %v650
      %v676 = vmul.f32 %v615, %v650
      %v677 = vmul.f32 %v618, %v650
      %v678 = vmul.f32 %v623, %v650
      %v679 = vmul.f32 %v626, %v650
      %v680 = vmul.f32 %v631, %v650
      %v681 = vmul.f32 %v634, %v650
      %v682 = vmul.f32 %v639, %v650
      %v683 = vmul.f32 %v642, %v650
      %v684 = vld [vmem:[%s3] sm:$0x1]
      %v686 = vlaneseq
      %v687 = vshrl.u32 %v686, 7
      %v688 = vsub.s32 0, %v687
      %v689 = vrot.slane %v684, %v688
      %v691 = vadd.f32 %v652, %v689
      %v692 = vadd.f32 %v653, %v689
      %v693 = vadd.f32 %v654, %v689
      %v694 = vadd.f32 %v655, %v689
      %v695 = vadd.f32 %v656, %v689
      %v696 = vadd.f32 %v657, %v689
      %v697 = vadd.f32 %v658, %v689
      %v698 = vadd.f32 %v659, %v689
      %v699 = vadd.f32 %v660, %v689
      %v700 = vadd.f32 %v661, %v689
      %v701 = vadd.f32 %v662, %v689
      %v702 = vadd.f32 %v663, %v689
      %v703 = vadd.f32 %v664, %v689
      %v704 = vadd.f32 %v665, %v689
      %v705 = vadd.f32 %v666, %v689
      %v706 = vadd.f32 %v667, %v689
      %v707 = vadd.f32 %v668, %v689
      %v708 = vadd.f32 %v669, %v689
      %v709 = vadd.f32 %v670, %v689
      %v710 = vadd.f32 %v671, %v689
      %v711 = vadd.f32 %v672, %v689
      %v712 = vadd.f32 %v673, %v689
      %v713 = vadd.f32 %v674, %v689
      %v714 = vadd.f32 %v675, %v689
      %v715 = vadd.f32 %v676, %v689
      %v716 = vadd.f32 %v677, %v689
      %v717 = vadd.f32 %v678, %v689
      %v718 = vadd.f32 %v679, %v689
      %v719 = vadd.f32 %v680, %v689
      %v720 = vadd.f32 %v681, %v689
      %v721 = vadd.f32 %v682, %v689
      %v722 = vadd.f32 %v683, %v689
      %v723 = vmax.f32 %v691, 0.0
      %v724 = vmax.f32 %v692, 0.0
      %v725 = vmax.f32 %v693, 0.0
      %v726 = vmax.f32 %v694, 0.0
      %v727 = vmax.f32 %v695, 0.0
      %v728 = vmax.f32 %v696, 0.0
      %v729 = vmax.f32 %v697, 0.0
      %v730 = vmax.f32 %v698, 0.0
      %v731 = vmax.f32 %v699, 0.0
      %v732 = vmax.f32 %v700, 0.0
      %v733 = vmax.f32 %v701, 0.0
      %v734 = vmax.f32 %v702, 0.0
      %v735 = vmax.f32 %v703, 0.0
      %v736 = vmax.f32 %v704, 0.0
      %v737 = vmax.f32 %v705, 0.0
      %v738 = vmax.f32 %v706, 0.0
      %v739 = vmax.f32 %v707, 0.0
      %v740 = vmax.f32 %v708, 0.0
      %v741 = vmax.f32 %v709, 0.0
      %v742 = vmax.f32 %v710, 0.0
      %v743 = vmax.f32 %v711, 0.0
      %v744 = vmax.f32 %v712, 0.0
      %v745 = vmax.f32 %v713, 0.0
      %v746 = vmax.f32 %v714, 0.0
      %v747 = vmax.f32 %v715, 0.0
      %v748 = vmax.f32 %v716, 0.0
      %v749 = vmax.f32 %v717, 0.0
      %v750 = vmax.f32 %v718, 0.0
      %v751 = vmax.f32 %v719, 0.0
      %v752 = vmax.f32 %v720, 0.0
      %v753 = vmax.f32 %v721, 0.0
      %v754 = vmax.f32 %v722, 0.0
      %v755 = vpack.c.bf16 %v724, %v723
      %v756 = vpack.c.bf16 %v726, %v725
      %v757 = vpack.c.bf16 %v728, %v727
      %v758 = vpack.c.bf16 %v730, %v729
      %v759 = vpack.c.bf16 %v732, %v731
      %v760 = vpack.c.bf16 %v734, %v733
      %v761 = vpack.c.bf16 %v736, %v735
      %v762 = vpack.c.bf16 %v738, %v737
      %v763 = vpack.c.bf16 %v740, %v739
      %v764 = vpack.c.bf16 %v742, %v741
      %v765 = vpack.c.bf16 %v744, %v743
      %v766 = vpack.c.bf16 %v746, %v745
      %v767 = vpack.c.bf16 %v748, %v747
      %v768 = vpack.c.bf16 %v750, %v749
      %v769 = vpack.c.bf16 %v752, %v751
      %v770 = vpack.c.bf16 %v754, %v753
      %v771 = vld [vmem:[%s4] sm:$0xf]
      %v772 = vld [vmem:[%s4 + $0x4] sm:$0xf]
      %v773 = vld [vmem:[%s4 + $0x8] sm:$0xf]
      %v774 = vld [vmem:[%s4 + $0xc] sm:$0xf]
      %v775 = vld [vmem:[%s4 + $0x10] sm:$0xf]
      %v776 = vld [vmem:[%s4 + $0x14] sm:$0xf]
      %v777 = vld [vmem:[%s4 + $0x18] sm:$0xf]
      %v778 = vld [vmem:[%s4 + $0x1c] sm:$0xf]
      %v779 = vld [vmem:[%s4 + $0x20] sm:$0xf]
      %v780 = vld [vmem:[%s4 + $0x24] sm:$0xf]
      %v781 = vld [vmem:[%s4 + $0x28] sm:$0xf]
      %v782 = vld [vmem:[%s4 + $0x2c] sm:$0xf]
      %v783 = vld [vmem:[%s4 + $0x30] sm:$0xf]
      %v784 = vld [vmem:[%s4 + $0x34] sm:$0xf]
      %v785 = vld [vmem:[%s4 + $0x38] sm:$0xf]
      %v786 = vld [vmem:[%s4 + $0x3c] sm:$0xf]
      %v787 = vld [vmem:[%s5] sm:$0x1]
      %v789 = vlaneseq
      %v790 = vshrl.u32 %v789, 7
      %v791 = vsub.s32 0, %v790
      %v792 = vrot.slane %v787, %v791
      %v810 = vunpack.c.l.b16 %v771
      %v811 = vunpack.c.l.b16 %v772
      %v812 = vunpack.c.l.b16 %v773
      %v813 = vunpack.c.l.b16 %v774
      %v814 = vunpack.c.l.b16 %v775
      %v815 = vunpack.c.l.b16 %v776
      %v816 = vunpack.c.l.b16 %v777
      %v817 = vunpack.c.l.b16 %v778
      %v818 = vunpack.c.l.b16 %v779
      %v819 = vunpack.c.l.b16 %v780
      %v820 = vunpack.c.l.b16 %v781
      %v821 = vunpack.c.l.b16 %v782
      %v822 = vunpack.c.l.b16 %v783
      %v823 = vunpack.c.l.b16 %v784
      %v824 = vunpack.c.l.b16 %v785
      %v825 = vunpack.c.l.b16 %v786
      %v826 = vpack.c.b16 %v811, %v810
      %v827 = vpack.c.b16 %v813, %v812
      %v828 = vpack.c.b16 %v815, %v814
      %v829 = vpack.c.b16 %v817, %v816
      %v830 = vpack.c.b16 %v819, %v818
      %v831 = vpack.c.b16 %v821, %v820
      %v832 = vpack.c.b16 %v823, %v822
      %v833 = vpack.c.b16 %v825, %v824
      %842 = vmatprep.subr.bf16.mxu0 0
      %843 = vmatpush1.bf16.msra.mxu0 %v826
      %844 = vmatprep.subr.bf16.mxu0 0
      %845 = vmatpush1.bf16.msra.mxu0 %v827
      %846 = vmatprep.subr.bf16.mxu0 0
      %847 = vmatpush1.bf16.msra.mxu0 %v828
      %848 = vmatprep.subr.bf16.mxu0 0
      %849 = vmatpush1.bf16.msra.mxu0 %v829
      %850 = vmatprep.subr.bf16.mxu0 0
      %851 = vmatpush1.bf16.msra.mxu0 %v830
      %852 = vmatprep.subr.bf16.mxu0 0
      %853 = vmatpush1.bf16.msra.mxu0 %v831
      %854 = vmatprep.subr.bf16.mxu0 0
      %855 = vmatpush1.bf16.msra.mxu0 %v832
      %856 = vmatprep.subr.bf16.mxu0 0
      %857 = vmatpush1.bf16.msra.mxu0 %v833
      %858 = vmatprep.subr.bf16.mxu0 0
      %859 = vmatpush1.bf16.msra.mxu0 0
      %860 = vmatprep.subr.bf16.mxu0 0
      %861 = vmatpush1.bf16.msra.mxu0 0
      %862 = vmatprep.subr.bf16.mxu0 0
      %863 = vmatpush1.bf16.msra.mxu0 0
      %864 = vmatprep.subr.bf16.mxu0 0
      %865 = vmatpush1.bf16.msra.mxu0 0
      %866 = vmatprep.subr.bf16.mxu0 0
      %867 = vmatpush1.bf16.msra.mxu0 0
      %868 = vmatprep.subr.bf16.mxu0 0
      %869 = vmatpush1.bf16.msra.mxu0 0
      %870 = vmatprep.subr.bf16.mxu0 0
      %871 = vmatpush1.bf16.msra.mxu0 0
      %872 = vmatprep.subr.bf16.mxu0 0
      %873 = vmatpush1.bf16.msra.mxu0 0
      %874 = vmatprep.mubr.bf16.mxu0 0
      %875 = vmatmul.mubr.bf16.gmra.mrb[0].mxu0 %v755
      %v876 = vpop.f32.mrb[0].mxu0
      %v877 = vadd.f32 %v792, %v876
      %v878 = vpop.f32.mrb[0].mxu0
      %v879 = vpop.f32.mrb[0].mxu0
      %v880 = vadd.f32 %v792, %v879
      %v881 = vpop.f32.mrb[0].mxu0
      %882 = vmatprep.mubr.bf16.mxu0 0
      %883 = vmatmul.mubr.bf16.gmra.mrb[0].mxu0 %v756
      %v884 = vpop.f32.mrb[0].mxu0
      %v885 = vadd.f32 %v792, %v884
      %v886 = vpop.f32.mrb[0].mxu0
      %v887 = vpop.f32.mrb[0].mxu0
      %v888 = vadd.f32 %v792, %v887
      %v889 = vpop.f32.mrb[0].mxu0
      %890 = vmatprep.mubr.bf16.mxu0 0
      %891 = vmatmul.mubr.bf16.gmra.mrb[0].mxu0 %v757
      %v892 = vpop.f32.mrb[0].mxu0
      %v893 = vadd.f32 %v792, %v892
      %v894 = vpop.f32.mrb[0].mxu0
      %v895 = vpop.f32.mrb[0].mxu0
      %v896 = vadd.f32 %v792, %v895
      %v897 = vpop.f32.mrb[0].mxu0
      %898 = vmatprep.mubr.bf16.mxu0 0
      %899 = vmatmul.mubr.bf16.gmra.mrb[0].mxu0 %v758
      %v900 = vpop.f32.mrb[0].mxu0
      %v901 = vadd.f32 %v792, %v900
      %v902 = vpop.f32.mrb[0].mxu0
      %v903 = vpop.f32.mrb[0].mxu0
      %v904 = vadd.f32 %v792, %v903
      %v905 = vpop.f32.mrb[0].mxu0
      %906 = vmatprep.mubr.bf16.mxu0 0
      %907 = vmatmul.mubr.bf16.gmra.mrb[0].mxu0 %v759
      %v908 = vpop.f32.mrb[0].mxu0
      %v909 = vadd.f32 %v792, %v908
      %v910 = vpop.f32.mrb[0].mxu0
      %v911 = vpop.f32.mrb[0].mxu0
      %v912 = vadd.f32 %v792, %v911
      %v913 = vpop.f32.mrb[0].mxu0
      %914 = vmatprep.mubr.bf16.mxu0 0
      %915 = vmatmul.mubr.bf16.gmra.mrb[0].mxu0 %v760
      %v916 = vpop.f32.mrb[0].mxu0
      %v917 = vadd.f32 %v792, %v916
      %v918 = vpop.f32.mrb[0].mxu0
      %v919 = vpop.f32.mrb[0].mxu0
      %v920 = vadd.f32 %v792, %v919
      %v921 = vpop.f32.mrb[0].mxu0
      %922 = vmatprep.mubr.bf16.mxu0 0
      %923 = vmatmul.mubr.bf16.gmra.mrb[0].mxu0 %v761
      %v924 = vpop.f32.mrb[0].mxu0
      %v925 = vadd.f32 %v792, %v924
      %v926 = vpop.f32.mrb[0].mxu0
      %v927 = vpop.f32.mrb[0].mxu0
      %v928 = vadd.f32 %v792, %v927
      %v929 = vpop.f32.mrb[0].mxu0
      %930 = vmatprep.mubr.bf16.mxu0 0
      %931 = vmatmul.mubr.bf16.gmra.mrb[0].mxu0 %v762
      %v932 = vpop.f32.mrb[0].mxu0
      %v933 = vadd.f32 %v792, %v932
      %v934 = vpop.f32.mrb[0].mxu0
      %v935 = vpop.f32.mrb[0].mxu0
      %v936 = vadd.f32 %v792, %v935
      %v937 = vpop.f32.mrb[0].mxu0
      %938 = vmatprep.mubr.bf16.mxu0 0
      %939 = vmatmul.mubr.bf16.gmra.mrb[0].mxu0 %v763
      %v940 = vpop.f32.mrb[0].mxu0
      %v941 = vadd.f32 %v792, %v940
      %v942 = vpop.f32.mrb[0].mxu0
      %v943 = vpop.f32.mrb[0].mxu0
      %v944 = vadd.f32 %v792, %v943
      %v945 = vpop.f32.mrb[0].mxu0
      %946 = vmatprep.mubr.bf16.mxu0 0
      %947 = vmatmul.mubr.bf16.gmra.mrb[0].mxu0 %v764
      %v948 = vpop.f32.mrb[0].mxu0
      %v949 = vadd.f32 %v792, %v948
      %v950 = vpop.f32.mrb[0].mxu0
      %v951 = vpop.f32.mrb[0].mxu0
      %v952 = vadd.f32 %v792, %v951
      %v953 = vpop.f32.mrb[0].mxu0
      %954 = vmatprep.mubr.bf16.mxu0 0
      %955 = vmatmul.mubr.bf16.gmra.mrb[0].mxu0 %v765
      %v956 = vpop.f32.mrb[0].mxu0
      %v957 = vadd.f32 %v792, %v956
      %v958 = vpop.f32.mrb[0].mxu0
      %v959 = vpop.f32.mrb[0].mxu0
      %v960 = vadd.f32 %v792, %v959
      %v961 = vpop.f32.mrb[0].mxu0
      %962 = vmatprep.mubr.bf16.mxu0 0
      %963 = vmatmul.mubr.bf16.gmra.mrb[0].mxu0 %v766
      %v964 = vpop.f32.mrb[0].mxu0
      %v965 = vadd.f32 %v792, %v964
      %v966 = vpop.f32.mrb[0].mxu0
      %v967 = vpop.f32.mrb[0].mxu0
      %v968 = vadd.f32 %v792, %v967
      %v969 = vpop.f32.mrb[0].mxu0
      %970 = vmatprep.mubr.bf16.mxu0 0
      %971 = vmatmul.mubr.bf16.gmra.mrb[0].mxu0 %v767
      %v972 = vpop.f32.mrb[0].mxu0
      %v973 = vadd.f32 %v792, %v972
      %v974 = vpop.f32.mrb[0].mxu0
      %v975 = vpop.f32.mrb[0].mxu0
      %v976 = vadd.f32 %v792, %v975
      %v977 = vpop.f32.mrb[0].mxu0
      %978 = vmatprep.mubr.bf16.mxu0 0
      %979 = vmatmul.mubr.bf16.gmra.mrb[0].mxu0 %v768
      %v980 = vpop.f32.mrb[0].mxu0
      %v981 = vadd.f32 %v792, %v980
      %v982 = vpop.f32.mrb[0].mxu0
      %v983 = vpop.f32.mrb[0].mxu0
      %v984 = vadd.f32 %v792, %v983
      %v985 = vpop.f32.mrb[0].mxu0
      %986 = vmatprep.mubr.bf16.mxu0 0
      %987 = vmatmul.mubr.bf16.gmra.mrb[0].mxu0 %v769
      %v988 = vpop.f32.mrb[0].mxu0
      %v989 = vadd.f32 %v792, %v988
      %v990 = vpop.f32.mrb[0].mxu0
      %v991 = vpop.f32.mrb[0].mxu0
      %v992 = vadd.f32 %v792, %v991
      %v993 = vpop.f32.mrb[0].mxu0
      %994 = vmatprep.mubr.bf16.mxu0 0
      %995 = vmatmul.mubr.bf16.gmra.mrb[0].mxu0 %v770
      %v996 = vpop.f32.mrb[0].mxu0
      %v997 = vadd.f32 %v792, %v996
      %v998 = vpop.f32.mrb[0].mxu0
      %v999 = vpop.f32.mrb[0].mxu0
      %v1000 = vadd.f32 %v792, %v999
      %v1001 = vpop.f32.mrb[0].mxu0
      %1002 = vdwg.mxu0
      %1003 = vst [vmem:[%s289] sm:$0xff] %v877
      %1004 = vst [vmem:[%s289 + $0x8] sm:$0xff] %v880
      %1005 = vst [vmem:[%s289 + $0x10] sm:$0xff] %v885
      %1006 = vst [vmem:[%s289 + $0x18] sm:$0xff] %v888
      %1007 = vst [vmem:[%s289 + $0x20] sm:$0xff] %v893
      %1008 = vst [vmem:[%s289 + $0x28] sm:$0xff] %v896
      %1009 = vst [vmem:[%s289 + $0x30] sm:$0xff] %v901
      %1010 = vst [vmem:[%s289 + $0x38] sm:$0xff] %v904
      %1011 = vst [vmem:[%s289 + $0x40] sm:$0xff] %v909
      %1012 = vst [vmem:[%s289 + $0x48] sm:$0xff] %v912
      %1013 = vst [vmem:[%s289 + $0x50] sm:$0xff] %v917
      %1014 = vst [vmem:[%s289 + $0x58] sm:$0xff] %v920
      %1015 = vst [vmem:[%s289 + $0x60] sm:$0xff] %v925
      %1016 = vst [vmem:[%s289 + $0x68] sm:$0xff] %v928
      %1017 = vst [vmem:[%s289 + $0x70] sm:$0xff] %v933
      %1018 = vst [vmem:[%s289 + $0x78] sm:$0xff] %v936
      %1019 = vst [vmem:[%s289 + $0x80] sm:$0xff] %v941
      %1020 = vst [vmem:[%s289 + $0x88] sm:$0xff] %v944
      %1021 = vst [vmem:[%s289 + $0x90] sm:$0xff] %v949
      %1022 = vst [vmem:[%s289 + $0x98] sm:$0xff] %v952
      %1023 = vst [vmem:[%s289 + $0xa0] sm:$0xff] %v957
      %1024 = vst [vmem:[%s289 + $0xa8] sm:$0xff] %v960
      %1025 = vst [vmem:[%s289 + $0xb0] sm:$0xff] %v965
      %1026 = vst [vmem:[%s289 + $0xb8] sm:$0xff] %v968
      %1027 = vst [vmem:[%s289 + $0xc0] sm:$0xff] %v973
      %1028 = vst [vmem:[%s289 + $0xc8] sm:$0xff] %v976
      %1029 = vst [vmem:[%s289 + $0xd0] sm:$0xff] %v981
      %1030 = vst [vmem:[%s289 + $0xd8] sm:$0xff] %v984
      %1031 = vst [vmem:[%s289 + $0xe0] sm:$0xff] %v989
      %1032 = vst [vmem:[%s289 + $0xe8] sm:$0xff] %v992
      %1033 = vst [vmem:[%s289 + $0xf0] sm:$0xff] %v997
      %1034 = vst [vmem:[%s289 + $0xf8] sm:$0xff] %v1000
      %s1035 = smul.u32 32, %s22
      %p1036 = scmp.lt.s32.totalorder %s21, 1
      %s1037 = scalar_select %p1036, %s21, 1
      %p1038 = scmp.lt.s32.totalorder %s1035, 31
      %s1039 = scalar_select %p1038, %s1035, 31
      %s1040 = smul.addr %s1037, 32
      %s1041 = sadd.s32 %s1039, %s1040
      %s1042 = smul.addr %s1041, 8
      %s1043 = scalar_lea.vmem %s6, %s1042
      // Predicated region
      $region45: #{neck_basic_block_pallas.1} parent=43 // pred_check
        %p1044 = pneg %p182
      $region46: #{neck_basic_block_pallas.1} parent=43 // pred_check_branch
        %1046 = sbr.rel (%p1044) target = $region48
      $region47: #{neck_basic_block_pallas.1} parent=43 // pred_region
        %s1047 = smul.u32 32, %s22
      $region48: #{neck_basic_block_pallas.1} parent=43 // pred_fallthru
        _
    $region44: #{neck_basic_block_pallas.1} parent=5 // pred_fallthru
      _
    %p1048 = scmp.le.s32.totalorder 2, %s12
    // Predicated region
    $region49: #{neck_basic_block_pallas.1} parent=5 // pred_check
      %p1049 = pneg %p1048
    $region50: #{neck_basic_block_pallas.1} parent=5 // pred_check_branch
      %1051 = sbr.rel (%p1049) target = $region52
    $region51: #{neck_basic_block_pallas.1} parent=5 // pred_region
      %s1052 = ssub.s32 %s12, 2
      // Predicated region
      $region53: #{neck_basic_block_pallas.1} parent=51 // pred_check
        %p1053 = pneg %p188
      $region54: #{neck_basic_block_pallas.1} parent=51 // pred_check_branch
        %1055 = sbr.rel (%p1053) target = $region56
      $region55: #{neck_basic_block_pallas.1} parent=51 // pred_region
        %s1056 = smul.u32 32, %s24
        %p1057 = scmp.lt.s32.totalorder %s23, 1
        %s1058 = scalar_select %p1057, %s23, 1
        %p1059 = scmp.lt.s32.totalorder %s1056, 31
        %s1060 = scalar_select %p1059, %s1056, 31
        %s1061 = smul.addr %s1058, 32
        %s1062 = sadd.s32 %s1060, %s1061
        %s1063 = smul.addr %s1062, 8
        %s1064 = scalar_lea.vmem %s6, %s1063
      $region56: #{neck_basic_block_pallas.1} parent=51 // pred_fallthru
        _
    $region52: #{neck_basic_block_pallas.1} parent=5 // pred_fallthru
      _
  $region6: #{neck_basic_block_pallas.1} parent=0 // loop_footer
    %s16 = sadd.s32 1, %s12
  $region7: #{neck_basic_block_pallas.1} parent=0 // loop_footer_branch
    %11 = sbr.rel target = $region3
  $region8: #{neck_basic_block_pallas.1} parent=0 // loop_exit
    _

</llo_original>
